<compile_context>
chip_gen: v7x
topology: tpu7x:2x2x1
jax: 0.10.0
libtpu: 0.0.40
codegen_flags: <defaults>
</compile_context>

<pallas_src>
import functools
import math

import jax
import jax.numpy as jnp
from jax import lax
from jax.experimental import pallas as pl
from jax.experimental.pallas import tpu as pltpu


# ---------------------------------------------------------------------------
# Tiled linear projection kernels
# ---------------------------------------------------------------------------

def _linear_kernel(x_ref, w_ref, o_ref):
    # native-dtype MXU operands, f32 accumulation
    o_ref[...] = jnp.dot(x_ref[...], w_ref[...],
                         preferred_element_type=jnp.float32).astype(o_ref.dtype)


def _linear_bias_kernel(x_ref, w_ref, b_ref, o_ref):
    y = jnp.dot(x_ref[...], w_ref[...], preferred_element_type=jnp.float32)
    o_ref[...] = (y + b_ref[...].astype(jnp.float32)).astype(o_ref.dtype)


def linear(x2d, w, b=None, *, tile_m=512):
    """x2d: (M, Cin), w: (Cin, Cout), optional b: (1, Cout) -> (M, Cout)."""
    M, Cin = x2d.shape
    Cout = w.shape[1]
    tm = M if M <= tile_m else tile_m          # tm == M or tm % 8 == 0
    grid = (pl.cdiv(M, tm),)

    el = x2d.dtype.itemsize
    cost = pl.CostEstimate(
        flops=2 * M * Cin * Cout,
        transcendentals=0,
        bytes_accessed=el * (M * Cin + Cin * Cout + M * Cout))

    in_specs = [
        pl.BlockSpec((tm, Cin), lambda i: (i, 0)),
        pl.BlockSpec((Cin, Cout), lambda i: (0, 0)),
    ]
    args = [x2d, w]
    kern = _linear_kernel
    if b is not None:
        in_specs.append(pl.BlockSpec((1, Cout), lambda i: (0, 0)))
        args.append(b)
        kern = _linear_bias_kernel

    return pl.pallas_call(
        kern,
        out_shape=jax.ShapeDtypeStruct((M, Cout), x2d.dtype),
        grid=grid,
        in_specs=in_specs,
        out_specs=pl.BlockSpec((tm, Cout), lambda i: (i, 0)),
        compiler_params=pltpu.CompilerParams(dimension_semantics=("parallel",)),
        cost_estimate=cost,
    )(*args)


# ---------------------------------------------------------------------------
# Attention kernel: one (batch, q-tile) per grid step, all heads in-kernel
# ---------------------------------------------------------------------------

def _mha_core_kernel(q_ref, k_ref, v_ref, o_ref, *, heads, dh, scale):
    q = q_ref[0]          # (TQ, D)  D = heads * dh, lane-dense
    k = k_ref[0]          # (Nk, D)
    v = v_ref[0]          # (Nk, D)

    outs = []
    for h in range(heads):                       # static unroll over heads
        lo, hi = h * dh, (h + 1) * dh
        qh = q[:, lo:hi]                         # (TQ, dh)
        kh = k[:, lo:hi]                         # (Nk, dh)
        vh = v[:, lo:hi]                         # (Nk, dh)

        # score = q @ k^T * 1/sqrt(dh)   (contract dh, no explicit transpose)
        s = lax.dot_general(qh, kh, (((1,), (1,)), ((), ())),
                            preferred_element_type=jnp.float32) * scale
        # numerically stable softmax; normalization fused into the epilogue
        s = s - jnp.max(s, axis=-1, keepdims=True)
        p = jnp.exp(s)
        denom = jnp.sum(p, axis=-1, keepdims=True)         # (TQ, 1)

        pv = jnp.dot(p.astype(vh.dtype), vh,
                     preferred_element_type=jnp.float32)    # (TQ, dh)
        # normalize with EUP reciprocal, add residual q (as in DotProductAttention)
        oh = pv * pl.reciprocal(denom, approx=True) + qh.astype(jnp.float32)
        outs.append(oh)

    o_ref[0] = jnp.concatenate(outs, axis=-1).astype(o_ref.dtype)


def dot_product_attention(q, k, v, *, heads, tile_q=512):
    """q: (B, Nq, D), k/v: (B, Nk, D) with D = heads*dh -> (B, Nq, D)."""
    B, Nq, D = q.shape
    Nk = k.shape[1]
    dh = D // heads
    scale = 1.0 / math.sqrt(float(dh))

    tq = Nq if Nq <= tile_q else tile_q          # tq == Nq or tq % 8 == 0
    grid = (B, pl.cdiv(Nq, tq))

    el = q.dtype.itemsize
    cost = pl.CostEstimate(
        flops=4 * B * heads * Nq * Nk * dh,
        transcendentals=B * heads * Nq * (Nk + 1),
        bytes_accessed=el * (2 * B * Nq * D + 2 * B * Nk * D))

    kern = functools.partial(_mha_core_kernel, heads=heads, dh=dh, scale=scale)
    return pl.pallas_call(
        kern,
        out_shape=jax.ShapeDtypeStruct((B, Nq, D), q.dtype),
        grid=grid,
        in_specs=[
            pl.BlockSpec((1, tq, D), lambda b, i: (b, i, 0)),
            pl.BlockSpec((1, Nk, D), lambda b, i: (b, 0, 0)),
            pl.BlockSpec((1, Nk, D), lambda b, i: (b, 0, 0)),
        ],
        out_specs=pl.BlockSpec((1, tq, D), lambda b, i: (b, i, 0)),
        compiler_params=pltpu.CompilerParams(
            dimension_semantics=("parallel", "parallel")),
        cost_estimate=cost,
    )(q, k, v)


# ---------------------------------------------------------------------------
# MultiHeadAttention forward
# ---------------------------------------------------------------------------

def init_params(key, query_channels, key_channels, value_dim):
    k1, k2, k3, k4, k5 = jax.random.split(key, 5)
    scale = 0.02
    return {
        # weights stored pre-transposed: (Cin, Cout)
        "wq": scale * jax.random.normal(k1, (query_channels, value_dim), jnp.float32),
        "wk": scale * jax.random.normal(k2, (key_channels, value_dim), jnp.float32),
        "wv": scale * jax.random.normal(k3, (key_channels, value_dim), jnp.float32),
        "wo": scale * jax.random.normal(k4, (value_dim, query_channels), jnp.float32),
        "bo": scale * jax.random.normal(k5, (1, query_channels), jnp.float32),
    }


def multi_head_attention(query, key, value, params, *, heads, value_dim,
                         query_shape, memory_shape):
    T_q, H_q, W_q, C_q = query_shape
    T_k, H_k, W_k, C_k = memory_shape
    B = query.shape[0]
    Nq = T_q * H_q * W_q
    Nk = T_k * H_k * W_k

    # q/k/v projections: bias=False in PyTorch -> no bias operand at all
    q = linear(query.reshape(-1, C_q), params["wq"])        # (B*Nq, value_dim)
    k = linear(key.reshape(-1, C_k), params["wk"])          # (B*Nk, value_dim)
    v = linear(value.reshape(-1, C_k), params["wv"])        # (B*Nk, value_dim)

    # Keep the lane-dense (B, N, value_dim) layout: the head split happens inside
    # the attention kernel (static channel slices), so no wrapper transposes.
    q = q.reshape(B, Nq, value_dim)
    k = k.reshape(B, Nk, value_dim)
    v = v.reshape(B, Nk, value_dim)

    head = dot_product_attention(q, k, v, heads=heads)      # (B, Nq, value_dim)

    # output projection (bias=True)
    out = linear(head.reshape(-1, value_dim), params["wo"], params["bo"])
    return out.reshape(B, T_q, H_q, W_q, C_q)


# ---------------------------------------------------------------------------
# Pure-JAX reference (same math) for a correctness check
# ---------------------------------------------------------------------------

def reference_mha(query, key, value, params, *, heads, value_dim,
                  query_shape, memory_shape):
    T_q, H_q, W_q, C_q = query_shape
    T_k, H_k, W_k, C_k = memory_shape
    B = query.shape[0]
    dh = value_dim // heads
    Nq, Nk = T_q * H_q * W_q, T_k * H_k * W_k

    q = query.reshape(-1, C_q) @ params["wq"]
    k = key.reshape(-1, C_k) @ params["wk"]
    v = value.reshape(-1, C_k) @ params["wv"]

    def sh(x, N):
        return x.reshape(B, N, heads, dh).transpose(0, 2, 1, 3)

    qh, kh, vh = sh(q, Nq), sh(k, Nk), sh(v, Nk)
    s = jnp.einsum("bhqd,bhkd->bhqk", qh, kh) / jnp.sqrt(jnp.float32(dh))
    p = jax.nn.softmax(s, axis=-1)
    o = jnp.einsum("bhqk,bhkd->bhqd", p, vh) + qh
    o = o.transpose(0, 2, 1, 3).reshape(B, T_q, H_q, W_q, value_dim)
    out = o.reshape(-1, value_dim) @ params["wo"] + params["bo"]
    return out.reshape(B, T_q, H_q, W_q, C_q)


if __name__ == "__main__":
    # small but representative: D = heads*dh = 128 lanes (lane-dense attention path)
    query_shape = (2, 4, 4, 16)     # (T, H, W, C)
    memory_shape = (2, 4, 4, 16)
    heads = 8
    value_dim = 128
    B = 2

    key0 = jax.random.PRNGKey(0)
    kq, kk, kv, kp = jax.random.split(key0, 4)
    query = jax.random.normal(kq, (B,) + query_shape, jnp.float32)
    key_in = jax.random.normal(kk, (B,) + memory_shape, jnp.float32)
    value = jax.random.normal(kv, (B,) + memory_shape, jnp.float32)

    params = init_params(kp, query_shape[-1], memory_shape[-1], value_dim)

    out = multi_head_attention(query, key_in, value, params,
                               heads=heads, value_dim=value_dim,
                               query_shape=query_shape, memory_shape=memory_shape)
    out = jax.block_until_ready(out)

    ref = reference_mha(query, key_in, value, params,
                        heads=heads, value_dim=value_dim,
                        query_shape=query_shape, memory_shape=memory_shape)

    assert out.shape == (B,) + query_shape
    # tolerance covers the EUP approx-reciprocal softmax normalization
    assert jnp.allclose(out, ref, atol=2e-3, rtol=2e-3), "mismatch vs JAX reference"

    print("KERNEL_OK")
</pallas_src>

<mosaic_0001>
module attributes {stable_mosaic.version = 11 : i64} {
  func.func @_linear_kernel(%arg0: i32, %arg1: memref<64x16xf32, #tpu.memory_space<vmem>>, %arg2: memref<16x128xf32, #tpu.memory_space<vmem>>, %arg3: memref<64x128xf32, #tpu.memory_space<vmem>>) attributes {dimension_semantics = [#tpu.dimension_semantics<parallel>], iteration_bounds = array<i64: 1>, scalar_prefetch = 0 : i64, scratch_operands = 0 : i64, tpu.core_type = #tpu.core_type<tc>, window_params = [{transform_indices = @transform_0, window_bounds = array<i64: 64, 16>}, {pipeline_mode = #tpu.pipeline_mode<synchronous>, transform_indices = @transform_1, window_bounds = array<i64: 16, 128>}, {transform_indices = @transform_2, window_bounds = array<i64: 64, 128>}]} {
    %c0 = arith.constant 0 : index
    %c0_0 = arith.constant 0 : index
    %0 = vector.load %arg1[%c0, %c0_0] : memref<64x16xf32, #tpu.memory_space<vmem>>, vector<64x16xf32>
    %c0_1 = arith.constant 0 : index
    %c0_2 = arith.constant 0 : index
    %1 = vector.load %arg2[%c0_1, %c0_2] : memref<16x128xf32, #tpu.memory_space<vmem>>, vector<16x128xf32>
    %cst = arith.constant dense<0.000000e+00> : vector<64x128xf32>
    %2 = tpu.matmul %0, %1, %cst {dimension_numbers = #tpu.dot_dimension_numbers<[1], [0], [0], [1], [0, 0, 1, 1], [], []>} : vector<64x16xf32>, vector<16x128xf32>, vector<64x128xf32> -> vector<64x128xf32>
    %c0_3 = arith.constant 0 : index
    %c0_4 = arith.constant 0 : index
    %3 = vector.load %arg3[%c0_3, %c0_4] : memref<64x128xf32, #tpu.memory_space<vmem>>, vector<64x128xf32>
    tpu.vector_store %arg3[%c0_3, %c0_4], %2 {strides = array<i32>} : memref<64x128xf32, #tpu.memory_space<vmem>>, vector<64x128xf32>,
    return
  }
  func.func @transform_0(%arg0: i32) -> (i32, i32) {
    %c0_i32 = arith.constant 0 : i32
    %c0_i32_0 = arith.constant 0 : i32
    return %arg0, %c0_i32 : i32, i32
  }
  func.func @transform_1(%arg0: i32) -> (i32, i32) {
    %c0_i32 = arith.constant 0 : i32
    %c0_i32_0 = arith.constant 0 : i32
    %c0_i32_1 = arith.constant 0 : i32
    return %c0_i32, %c0_i32_0 : i32, i32
  }
  func.func @transform_2(%arg0: i32) -> (i32, i32) {
    %c0_i32 = arith.constant 0 : i32
    %c0_i32_0 = arith.constant 0 : i32
    return %arg0, %c0_i32 : i32, i32
  }
}

</mosaic_0001>

<llo_original>
// kernel: tpu_custom_call.1
$region0: #{tpu_custom_call.1}
  #allocation0 [shape = 'u32[]', space=smem, size = 0x4, offset = 0x4, fixed_abs, tag = 'smem constant byte address 0x4 - core index']
  #allocation1 [shape = 'u32[144,128]{1,0:T(1,128)}', space=vmem, size = 0x12000, scoped, tag = 'internal scratch']
  %s0 = inlined_call_operand.vmem [shape: f32[64,16], index: 0, kind: input, shape index: {}]
  %s1 = inlined_call_operand.vmem [shape: f32[16,128], index: 1, kind: input, shape index: {}]
  %s2 = inlined_call_operand.hbm [shape: f32[64,128], index: 2, kind: output, shape index: {}]
  %s3 = sld [smem:[#allocation0]]
  $region18: #{tpu_custom_call.1} parent=0
    _
  %s5 = ssub.s32 1, %s3
  %s6 = scalar_select 0, %s5, %s3
  $region1: #{tpu_custom_call.1} parent=0
    #allocation2 [shape = 'u8[32768]{0}', space=vmem, size = 0x8000, scoped, tag = 'output window, operand 0, single buffered']
    #allocation3 [shape = 's32[1]{0}', space=sflag, size = 0x4, scoped, tag = 'scoped memory for tpu_custom_call.1']
    %7 = vsyncpa [#allocation3], 0
    // Predicated region
    $region2: #{tpu_custom_call.1} parent=1 // pred_check
      _
    $region3: #{tpu_custom_call.1} parent=1 // pred_check_branch
      %9 = sbr.rel (0) target = $region5
    $region4: #{tpu_custom_call.1} parent=1 // pred_region
      _
    $region5: #{tpu_custom_call.1} parent=1 // pred_fallthru
      _
    // Predicated region
    $region6: #{tpu_custom_call.1} parent=1 // pred_check
      _
    $region7: #{tpu_custom_call.1} parent=1 // pred_check_branch
      %11 = sbr.rel (0) target = $region9
    $region8: #{tpu_custom_call.1} parent=1 // pred_region
      _
    $region9: #{tpu_custom_call.1} parent=1 // pred_fallthru
      _
    %v12 = vld [vmem:[%s0] sm:$0xff]
    %v13 = vld [vmem:[%s0 + $0x8] sm:$0xff]
    %v14 = vld [vmem:[%s0 + $0x10] sm:$0xff]
    %v15 = vld [vmem:[%s0 + $0x18] sm:$0xff]
    %v16 = vld [vmem:[%s0 + $0x20] sm:$0xff]
    %v17 = vld [vmem:[%s0 + $0x28] sm:$0xff]
    %v18 = vld [vmem:[%s0 + $0x30] sm:$0xff]
    %v19 = vld [vmem:[%s0 + $0x38] sm:$0xff]
    %v20 = vld [vmem:[%s1] sm:$0xff]
    %v21 = vld [vmem:[%s1 + $0x8] sm:$0xff]
    %vm22 = vcmask 130048
    %v24 = vsel %vm22, %v12, 0
    %v27 = vsel %vm22, %v13, 0
    %v30 = vsel %vm22, %v14, 0
    %v33 = vsel %vm22, %v15, 0
    %v36 = vsel %vm22, %v16, 0
    %v39 = vsel %vm22, %v17, 0
    %v42 = vsel %vm22, %v18, 0
    %v45 = vsel %vm22, %v19, 0
    %47 = vmatprep.subr.mxu0 0.0
    %48 = vmatpush1.msra.mxu0 %v20
    %49 = vmatprep.subr.mxu0 0.0
    %50 = vmatpush1.msra.mxu0 %v21
    %51 = vmatprep.subr.mxu0 0.0
    %52 = vmatpush1.msra.mxu0 0.0
    %53 = vmatprep.subr.mxu0 0.0
    %54 = vmatpush1.msra.mxu0 0.0
    %55 = vmatprep.subr.mxu0 0.0
    %56 = vmatpush1.msra.mxu0 0.0
    %57 = vmatprep.subr.mxu0 0.0
    %58 = vmatpush1.msra.mxu0 0.0
    %59 = vmatprep.subr.mxu0 0.0
    %60 = vmatpush1.msra.mxu0 0.0
    %61 = vmatprep.subr.mxu0 0.0
    %62 = vmatpush1.msra.mxu0 0.0
    %63 = vmatprep.subr.mxu0 0.0
    %64 = vmatpush1.msra.mxu0 0.0
    %65 = vmatprep.subr.mxu0 0.0
    %66 = vmatpush1.msra.mxu0 0.0
    %67 = vmatprep.subr.mxu0 0.0
    %68 = vmatpush1.msra.mxu0 0.0
    %69 = vmatprep.subr.mxu0 0.0
    %70 = vmatpush1.msra.mxu0 0.0
    %71 = vmatprep.subr.mxu0 0.0
    %72 = vmatpush1.msra.mxu0 0.0
    %73 = vmatprep.subr.mxu0 0.0
    %74 = vmatpush1.msra.mxu0 0.0
    %75 = vmatprep.subr.mxu0 0.0
    %76 = vmatpush1.msra.mxu0 0.0
    %77 = vmatprep.subr.mxu0 0.0
    %78 = vmatpush1.msra.mxu0 0.0
    %79 = vmatprep.subr.mxu0 0.0
    %80 = vmatpush1.msra.mxu0 0.0
    %81 = vmatprep.subr.mxu0 0.0
    %82 = vmatpush1.msra.mxu0 0.0
    %83 = vmatprep.subr.mxu0 0.0
    %84 = vmatpush1.msra.mxu0 0.0
    %85 = vmatprep.subr.mxu0 0.0
    %86 = vmatpush1.msra.mxu0 0.0
    %87 = vmatprep.subr.mxu0 0.0
    %88 = vmatpush1.msra.mxu0 0.0
    %89 = vmatprep.subr.mxu0 0.0
    %90 = vmatpush1.msra.mxu0 0.0
    %91 = vmatprep.subr.mxu0 0.0
    %92 = vmatpush1.msra.mxu0 0.0
    %93 = vmatprep.subr.mxu0 0.0
    %94 = vmatpush1.msra.mxu0 0.0
    %95 = vmatprep.subr.mxu0 0.0
    %96 = vmatpush1.msra.mxu0 0.0
    %97 = vmatprep.subr.mxu0 0.0
    %98 = vmatpush1.msra.mxu0 0.0
    %99 = vmatprep.subr.mxu0 0.0
    %100 = vmatpush1.msra.mxu0 0.0
    %101 = vmatprep.subr.mxu0 0.0
    %102 = vmatpush1.msra.mxu0 0.0
    %103 = vmatprep.subr.mxu0 0.0
    %104 = vmatpush1.msra.mxu0 0.0
    %105 = vmatprep.subr.mxu0 0.0
    %106 = vmatpush1.msra.mxu0 0.0
    %107 = vmatprep.subr.mxu0 0.0
    %108 = vmatpush1.msra.mxu0 0.0
    %109 = vmatprep.subr.mxu0 0.0
    %110 = vmatpush1.msra.mxu0 0.0
    %111 = vmatprep.mubr.f32.mxu0 0.0
    %112 = vmatmul.mubr.f32.gmra.mrb[0].mxu0 %v24
    %v113 = vpop.f32.mrb[0].mxu0
    %v114 = vadd.f32 0.0, %v113
    %v115 = vpop.f32.mrb[0].mxu0
    %116 = vmatprep.mubr.f32.mxu0 0.0
    %117 = vmatmul.mubr.f32.gmra.mrb[0].mxu0 %v27
    %v118 = vpop.f32.mrb[0].mxu0
    %v119 = vadd.f32 0.0, %v118
    %v120 = vpop.f32.mrb[0].mxu0
    %121 = vmatprep.mubr.f32.mxu0 0.0
    %122 = vmatmul.mubr.f32.gmra.mrb[0].mxu0 %v30
    %v123 = vpop.f32.mrb[0].mxu0
    %v124 = vadd.f32 0.0, %v123
    %v125 = vpop.f32.mrb[0].mxu0
    %126 = vmatprep.mubr.f32.mxu0 0.0
    %127 = vmatmul.mubr.f32.gmra.mrb[0].mxu0 %v33
    %v128 = vpop.f32.mrb[0].mxu0
    %v129 = vadd.f32 0.0, %v128
    %v130 = vpop.f32.mrb[0].mxu0
    %131 = vmatprep.mubr.f32.mxu0 0.0
    %132 = vmatmul.mubr.f32.gmra.mrb[0].mxu0 %v36
    %v133 = vpop.f32.mrb[0].mxu0
    %v134 = vadd.f32 0.0, %v133
    %v135 = vpop.f32.mrb[0].mxu0
    %136 = vmatprep.mubr.f32.mxu0 0.0
    %137 = vmatmul.mubr.f32.gmra.mrb[0].mxu0 %v39
    %v138 = vpop.f32.mrb[0].mxu0
    %v139 = vadd.f32 0.0, %v138
    %v140 = vpop.f32.mrb[0].mxu0
    %141 = vmatprep.mubr.f32.mxu0 0.0
    %142 = vmatmul.mubr.f32.gmra.mrb[0].mxu0 %v42
    %v143 = vpop.f32.mrb[0].mxu0
    %v144 = vadd.f32 0.0, %v143
    %v145 = vpop.f32.mrb[0].mxu0
    %146 = vmatprep.mubr.f32.mxu0 0.0
    %147 = vmatmul.mubr.f32.gmra.mrb[0].mxu0 %v45
    %v148 = vpop.f32.mrb[0].mxu0
    %v149 = vadd.f32 0.0, %v148
    %v150 = vpop.f32.mrb[0].mxu0
    %151 = vdwg.mxu0
    %152 = vst [vmem:[#allocation2] sm:$0xff] %v114
    %153 = vst [vmem:[#allocation2 + $0x8] sm:$0xff] %v119
    %154 = vst [vmem:[#allocation2 + $0x10] sm:$0xff] %v124
    %155 = vst [vmem:[#allocation2 + $0x18] sm:$0xff] %v129
    %156 = vst [vmem:[#allocation2 + $0x20] sm:$0xff] %v134
    %157 = vst [vmem:[#allocation2 + $0x28] sm:$0xff] %v139
    %158 = vst [vmem:[#allocation2 + $0x30] sm:$0xff] %v144
    %159 = vst [vmem:[#allocation2 + $0x38] sm:$0xff] %v149
    // Predicated region
    $region10: #{tpu_custom_call.1} parent=1 // pred_check
      _
    $region11: #{tpu_custom_call.1} parent=1 // pred_check_branch
      %161 = sbr.rel (0) target = $region13
    $region12: #{tpu_custom_call.1} parent=1 // pred_region
      %s163 = ssub.s32 1024, 1024
      %164 = vsyncadd [#allocation3], %s163
      %s165 = sshll.u32 [#allocation2], 4
      %s166 = int_to_ptr.vmem [resolvable:$true] %s165
      %171 = dma.vmem_to_hbm [thread:$0]  %s166, 1024, %s2, [#allocation3], 128, 128, 8
    $region13: #{tpu_custom_call.1} parent=1 // pred_fallthru
      _
    // Predicated region
    $region14: #{tpu_custom_call.1} parent=1 // pred_check
      _
    $region15: #{tpu_custom_call.1} parent=1 // pred_check_branch
      %173 = sbr.rel (0) target = $region17
    $region16: #{tpu_custom_call.1} parent=1 // pred_region
      %174 = dma.done [#allocation3], 1024
    $region17: #{tpu_custom_call.1} parent=1 // pred_fallthru
      _
    %175 = vsyncpa [#allocation3], 1

</llo_original>
